<compile_context>
chip_gen: v6e
topology: v6e:2x2x1
jax: 0.10.0
libtpu: 0.0.40
codegen_flags: <defaults>
</compile_context>

<pallas_src>
import functools
import math

import jax
import jax.numpy as jnp
from jax.experimental import pallas as pl
from jax.experimental.pallas import tpu as pltpu


def _rmsnorm_kernel(x_ref, w_ref, o_ref, *, eps: float, input_dtype):
    """fold == 1 path: the whole lane axis is a single head."""
    x = x_ref[...].astype(jnp.float32)
    # Cross-lane reduce on the XLU — free in this HBM-bound kernel, exact f32.
    mean = jnp.mean(x * x, axis=-1, keepdims=True)
    normed = x * jax.lax.rsqrt(mean + eps)
    # PyTorch parity: weight * hidden.to(input_dtype), multiply in the
    # promoted (output) dtype.
    y = normed.astype(input_dtype).astype(o_ref.dtype)
    o_ref[...] = w_ref[...] * y


def _rmsnorm_folded_kernel(x_ref, seg_ref, w_ref, o_ref, *, eps: float,
                           inv_head_dim: float, input_dtype):
    """fold > 1 path: several heads share one lane-dense row.

    Per-head sums are a block-diagonal 0/1 matmul on the otherwise-idle MXU.
    The f32 operand is split into three bf16-exact terms so the default
    bf16-operand MXU precision still produces an f32-accurate mean.
    """
    x = x_ref[...].astype(jnp.float32)
    xx = x * x
    hi = xx.astype(jnp.bfloat16).astype(jnp.float32)
    rem = xx - hi
    mid = rem.astype(jnp.bfloat16).astype(jnp.float32)
    lo = rem - mid
    seg = seg_ref[...]                                   # exact 0/1 entries
    ssum = (jnp.dot(hi, seg, preferred_element_type=jnp.float32)
            + jnp.dot(mid, seg, preferred_element_type=jnp.float32)
            + jnp.dot(lo, seg, preferred_element_type=jnp.float32))
    mean = ssum * inv_head_dim                           # VPU scale, f32
    normed = x * jax.lax.rsqrt(mean + eps)
    y = normed.astype(input_dtype).astype(o_ref.dtype)
    o_ref[...] = w_ref[...] * y


def _choose_fold(head_dim: int, rows: int) -> int:
    """Heads folded into the lane axis so the last block dim reaches 128."""
    if head_dim % 128 == 0 or rows <= 1:
        return 1
    target = 128 // math.gcd(head_dim, 128)
    # Keep the folded width (and the seg matrix) small.
    while target > 1 and target * head_dim > 512:
        target //= 2
    return max(1, math.gcd(target, rows))


def _choose_row_tile(rows2: int, width: int, itemsize: int,
                     target_bytes: int, cap: int = 8192) -> int:
    """Row tile sized by real HBM bytes per block; always a sublane multiple
    (or the full extent for tiny inputs). Ragged tails are masked by Pallas."""
    sub = max(8, 32 // max(1, itemsize))       # 8 f32 / 16 bf16 / 32 int8
    max_rows = target_bytes // max(1, width * itemsize)
    max_rows = max(sub, (max_rows // sub) * sub)
    max_rows = min(max_rows, cap)
    if rows2 > max_rows:
        return max_rows
    # Fits in one block: still split so v7x's two TensorCores get work and
    # the DMA pipeline has something to overlap.
    if rows2 >= 4 * sub:
        t = -(-rows2 // 4)                     # aim for ~4 blocks
        t = -(-t // sub) * sub                 # round up to sublane multiple
        return min(t, max_rows)
    return rows2


def _device_tuning():
    """(target HBM bytes per block, scoped VMEM limit)."""
    try:
        kind = jax.devices()[0].device_kind.lower()
    except Exception:
        kind = ""
    if "v7" in kind:
        # 3.2 TB/s HBM: bigger blocks amortize per-step overhead; stay well
        # under the 64 MiB physical VMEM.
        return 4 << 20, 44 * 1024 * 1024
    # v5e / v6e (and unknown): ~2 MiB blocks hit 85%+ of roofline; 32 MiB
    # scoped VMEM clears v5e's 16 MiB default.
    return 2 << 20, 32 * 1024 * 1024


def qwen3_rmsnorm(hidden_states: jax.Array, weight: jax.Array,
                  eps: float = 1e-6) -> jax.Array:
    """RMSNorm over the last axis (head_dim), Pallas TPU kernel."""
    input_dtype = hidden_states.dtype
    head_dim = hidden_states.shape[-1]
    assert weight.shape == (head_dim,)

    orig_shape = hidden_states.shape
    rows = 1
    for d in orig_shape[:-1]:
        rows *= d
    out_dtype = jnp.promote_types(input_dtype, weight.dtype)
    if rows == 0:
        return jnp.zeros(orig_shape, out_dtype)

    fold = _choose_fold(head_dim, rows)
    width = fold * head_dim
    rows2 = rows // fold

    # Pure-metadata reshape: `fold` consecutive heads share one lane-dense row.
    x2d = hidden_states.reshape(rows2, width)

    target_bytes, vmem_limit = _device_tuning()
    itemsize = jnp.dtype(input_dtype).itemsize
    row_tile = _choose_row_tile(rows2, width, itemsize, target_bytes)
    grid = (pl.cdiv(rows2, row_tile),)         # ragged tail block is masked

    # Weight tiled across folded heads, kept in the promoted (output) dtype so
    # the epilogue multiply matches PyTorch's promoted-dtype multiply exactly.
    w_row = jnp.tile(weight.astype(out_dtype), fold).reshape(1, width)

    x_spec = pl.BlockSpec((row_tile, width), lambda i: (i, 0))
    w_spec = pl.BlockSpec((1, width), lambda i: (0, 0))
    o_spec = pl.BlockSpec((row_tile, width), lambda i: (i, 0))

    if fold == 1:
        kernel = functools.partial(_rmsnorm_kernel, eps=float(eps),
                                   input_dtype=input_dtype)
        in_specs = [x_spec, w_spec]
        args = (x2d, w_row)
    else:
        # Block-diagonal 0/1 segmentation matrix (exact in any MXU precision).
        head_id = jnp.arange(width, dtype=jnp.int32) // head_dim
        seg = (head_id[:, None] == head_id[None, :]).astype(jnp.float32)
        kernel = functools.partial(_rmsnorm_folded_kernel, eps=float(eps),
                                   inv_head_dim=1.0 / float(head_dim),
                                   input_dtype=input_dtype)
        in_specs = [x_spec, pl.BlockSpec((width, width), lambda i: (0, 0)),
                    w_spec]
        args = (x2d, seg, w_row)

    out = pl.pallas_call(
        kernel,
        out_shape=jax.ShapeDtypeStruct((rows2, width), out_dtype),
        grid_spec=pltpu.PrefetchScalarGridSpec(
            num_scalar_prefetch=0,
            grid=grid,
            in_specs=in_specs,
            out_specs=o_spec,
        ),
        compiler_params=pltpu.CompilerParams(
            dimension_semantics=("parallel",),
            vmem_limit_bytes=vmem_limit,
        ),
    )(*args)

    return out.reshape(orig_shape)


def qwen3_rmsnorm_ref(hidden_states, weight, eps=1e-6):
    """Pure-JAX reference matching the PyTorch forward."""
    input_dtype = hidden_states.dtype
    x = hidden_states.astype(jnp.float32)
    variance = jnp.mean(x * x, axis=-1, keepdims=True)
    x = x * jax.lax.rsqrt(variance + eps)
    return weight * x.astype(input_dtype)


if __name__ == "__main__":
    key = jax.random.PRNGKey(0)
    ks = jax.random.split(key, 4)

    # Case 1: small head_dim (32) — head-folding / lane-dense MXU-mean path.
    x1 = jax.random.normal(ks[0], (2, 8, 4, 32), dtype=jnp.float32)
    w1 = 1.0 + 0.05 * jnp.arange(32, dtype=jnp.float32)
    o1 = jax.block_until_ready(qwen3_rmsnorm(x1, w1, eps=1e-6))
    r1 = qwen3_rmsnorm_ref(x1, w1, eps=1e-6)
    assert o1.shape == r1.shape and o1.dtype == r1.dtype
    assert jnp.allclose(o1, r1, atol=1e-5, rtol=1e-5)

    # Case 2: head_dim=128 (real Qwen3 q/k-norm) — fold==1, multi-block grid.
    x2 = jax.random.normal(ks[1], (2, 8, 2, 128), dtype=jnp.float32)
    w2 = 1.0 + 0.01 * jnp.arange(128, dtype=jnp.float32)
    o2 = jax.block_until_ready(qwen3_rmsnorm(x2, w2, eps=1e-6))
    r2 = qwen3_rmsnorm_ref(x2, w2, eps=1e-6)
    assert o2.shape == r2.shape and o2.dtype == r2.dtype
    assert jnp.allclose(o2, r2, atol=1e-5, rtol=1e-5)

    # Case 3: ragged row count (40 rows, 16-row tiles) — masked tail block,
    # no wrapper-side padding copy.
    x3 = jax.random.normal(ks[2], (5, 4, 2, 128), dtype=jnp.float32)
    o3 = jax.block_until_ready(qwen3_rmsnorm(x3, w2, eps=1e-6))
    r3 = qwen3_rmsnorm_ref(x3, w2, eps=1e-6)
    assert o3.shape == r3.shape and o3.dtype == r3.dtype
    assert jnp.allclose(o3, r3, atol=1e-5, rtol=1e-5)

    # Case 4: bf16 activations with f32 weight (deployment dtype). Loose
    # tolerance: a 1-ulp bf16 flip at a rounding boundary is acceptable.
    x4 = jax.random.normal(ks[3], (2, 8, 2, 128),
                           dtype=jnp.float32).astype(jnp.bfloat16)
    o4 = jax.block_until_ready(qwen3_rmsnorm(x4, w2, eps=1e-6))
    r4 = qwen3_rmsnorm_ref(x4, w2, eps=1e-6)
    assert o4.shape == r4.shape and o4.dtype == r4.dtype
    assert jnp.allclose(o4.astype(jnp.float32), r4.astype(jnp.float32),
                        atol=2e-2, rtol=2e-2)

    print("KERNEL_OK")
</pallas_src>

<mosaic_0001>
module attributes {stable_mosaic.version = 11 : i64} {
  func.func @_rmsnorm_folded_kernel(%arg0: i32, %arg1: memref<16x128xf32, #tpu.memory_space<vmem>>, %arg2: memref<128x128xf32, #tpu.memory_space<vmem>>, %arg3: memref<1x128xf32, #tpu.memory_space<vmem>>, %arg4: memref<16x128xf32, #tpu.memory_space<vmem>>) attributes {dimension_semantics = [#tpu.dimension_semantics<parallel>], iteration_bounds = array<i64: 1>, scalar_prefetch = 0 : i64, scratch_operands = 0 : i64, tpu.core_type = #tpu.core_type<tc>, window_params = [{transform_indices = @transform_0, window_bounds = array<i64: 16, 128>}, {pipeline_mode = #tpu.pipeline_mode<synchronous>, transform_indices = @transform_1, window_bounds = array<i64: 128, 128>}, {pipeline_mode = #tpu.pipeline_mode<synchronous>, transform_indices = @transform_2, window_bounds = array<i64: 1, 128>}, {transform_indices = @transform_3, window_bounds = array<i64: 16, 128>}]} {
    %c0 = arith.constant 0 : index
    %c0_0 = arith.constant 0 : index
    %0 = vector.load %arg1[%c0, %c0_0] : memref<16x128xf32, #tpu.memory_space<vmem>>, vector<16x128xf32>
    %1 = arith.mulf %0, %0 : vector<16x128xf32>
    %2 = arith.truncf %1 : vector<16x128xf32> to vector<16x128xbf16>
    %3 = arith.extf %2 : vector<16x128xbf16> to vector<16x128xf32>
    %4 = arith.subf %1, %3 : vector<16x128xf32>
    %5 = arith.truncf %4 : vector<16x128xf32> to vector<16x128xbf16>
    %6 = arith.extf %5 : vector<16x128xbf16> to vector<16x128xf32>
    %7 = arith.subf %4, %6 : vector<16x128xf32>
    %c0_1 = arith.constant 0 : index
    %c0_2 = arith.constant 0 : index
    %8 = vector.load %arg2[%c0_1, %c0_2] : memref<128x128xf32, #tpu.memory_space<vmem>>, vector<128x128xf32>
    %cst = arith.constant dense<0.000000e+00> : vector<16x128xf32>
    %9 = tpu.matmul %3, %8, %cst {dimension_numbers = #tpu.dot_dimension_numbers<[1], [0], [0], [1], [0, 0, 1, 1], [], []>} : vector<16x128xf32>, vector<128x128xf32>, vector<16x128xf32> -> vector<16x128xf32>
    %cst_3 = arith.constant dense<0.000000e+00> : vector<16x128xf32>
    %10 = tpu.matmul %6, %8, %cst_3 {dimension_numbers = #tpu.dot_dimension_numbers<[1], [0], [0], [1], [0, 0, 1, 1], [], []>} : vector<16x128xf32>, vector<128x128xf32>, vector<16x128xf32> -> vector<16x128xf32>
    %11 = arith.addf %9, %10 : vector<16x128xf32>
    %cst_4 = arith.constant dense<0.000000e+00> : vector<16x128xf32>
    %12 = tpu.matmul %7, %8, %cst_4 {dimension_numbers = #tpu.dot_dimension_numbers<[1], [0], [0], [1], [0, 0, 1, 1], [], []>} : vector<16x128xf32>, vector<128x128xf32>, vector<16x128xf32> -> vector<16x128xf32>
    %13 = arith.addf %11, %12 : vector<16x128xf32>
    %cst_5 = arith.constant 3.125000e-02 : f32
    %14 = vector.broadcast %cst_5 : f32 to vector<16x128xf32>
    %15 = arith.mulf %13, %14 : vector<16x128xf32>
    %cst_6 = arith.constant 9.99999997E-7 : f32
    %16 = vector.broadcast %cst_6 : f32 to vector<16x128xf32>
    %17 = arith.addf %15, %16 : vector<16x128xf32>
    %18 = math.rsqrt %17 : vector<16x128xf32>
    %19 = arith.mulf %0, %18 : vector<16x128xf32>
    %c0_7 = arith.constant 0 : index
    %c0_8 = arith.constant 0 : index
    %20 = vector.load %arg3[%c0_7, %c0_8] : memref<1x128xf32, #tpu.memory_space<vmem>>, vector<1x128xf32>
    %21 = vector.broadcast %20 : vector<1x128xf32> to vector<16x128xf32>
    %22 = arith.mulf %21, %19 : vector<16x128xf32>
    %c0_9 = arith.constant 0 : index
    %c0_10 = arith.constant 0 : index
    %23 = vector.load %arg4[%c0_9, %c0_10] : memref<16x128xf32, #tpu.memory_space<vmem>>, vector<16x128xf32>
    tpu.vector_store %arg4[%c0_9, %c0_10], %22 {strides = array<i32>} : memref<16x128xf32, #tpu.memory_space<vmem>>, vector<16x128xf32>,
    return
  }
  func.func @transform_0(%arg0: i32) -> (i32, i32) {
    %c0_i32 = arith.constant 0 : i32
    %c0_i32_0 = arith.constant 0 : i32
    return %arg0, %c0_i32 : i32, i32
  }
  func.func @transform_1(%arg0: i32) -> (i32, i32) {
    %c0_i32 = arith.constant 0 : i32
    %c0_i32_0 = arith.constant 0 : i32
    %c0_i32_1 = arith.constant 0 : i32
    return %c0_i32, %c0_i32_0 : i32, i32
  }
  func.func @transform_2(%arg0: i32) -> (i32, i32) {
    %c0_i32 = arith.constant 0 : i32
    %c0_i32_0 = arith.constant 0 : i32
    %c0_i32_1 = arith.constant 0 : i32
    return %c0_i32, %c0_i32_0 : i32, i32
  }
  func.func @transform_3(%arg0: i32) -> (i32, i32) {
    %c0_i32 = arith.constant 0 : i32
    %c0_i32_0 = arith.constant 0 : i32
    return %arg0, %c0_i32 : i32, i32
  }
}

</mosaic_0001>

<llo_original>
// kernel: tpu_custom_call.1
$region0: #{tpu_custom_call.1}
  #allocation0 [shape = 'u32[]', space=smem, size = 0x4, offset = 0x4, fixed_abs, tag = 'smem constant byte address 0x4 - core index']
  #allocation1 [shape = 'u32[144,128]{1,0:T(1,128)}', space=vmem, size = 0x12000, scoped, tag = 'internal scratch']
  %s0 = inlined_call_operand.hbm [shape: f32[16,128], index: 0, kind: input, shape index: {}]
  %s1 = inlined_call_operand.hbm [shape: f32[128,128], index: 1, kind: input, shape index: {}]
  %s2 = inlined_call_operand.vmem [shape: f32[1,128], index: 2, kind: input, shape index: {}]
  %s3 = inlined_call_operand.hbm [shape: f32[16,128], index: 3, kind: output, shape index: {}]
  %s4 = sld [smem:[#allocation0]]
  $region30: #{tpu_custom_call.1} parent=0
    _
  %s6 = ssub.s32 1, %s4
  %s7 = scalar_select 0, %s6, %s4
  $region1: #{tpu_custom_call.1} parent=0
    #allocation2 [shape = 'u8[8192]{0}', space=vmem, size = 0x2000, scoped, tag = 'input window, operand 0, single buffered']
    #allocation3 [shape = 's32[1]{0}', space=sflag, size = 0x4, scoped, tag = 'scoped memory for tpu_custom_call.1']
    #allocation4 [shape = 's32[1]{0}', space=sflag, size = 0x4, scoped, tag = 'scoped memory for tpu_custom_call.1']
    #allocation5 [shape = 'u8[65536]{0}', space=vmem, size = 0x10000, scoped, tag = 'input window, operand 1, single buffered']
    #allocation6 [shape = 's32[1]{0}', space=sflag, size = 0x4, scoped, tag = 'scoped memory for tpu_custom_call.1']
    #allocation7 [shape = 'u8[8192]{0}', space=vmem, size = 0x2000, scoped, tag = 'output window, operand 0, single buffered']
    %8 = vsyncpa [#allocation3], 0
    %9 = vsyncpa [#allocation6], 0
    %10 = vsyncpa [#allocation4], 0
    // Predicated region
    $region2: #{tpu_custom_call.1} parent=1 // pred_check
      _
    $region3: #{tpu_custom_call.1} parent=1 // pred_check_branch
      %12 = sbr.rel (0) target = $region5
    $region4: #{tpu_custom_call.1} parent=1 // pred_region
      %s14 = ssub.s32 256, 256
      %15 = vsyncadd [#allocation3], %s14
      %s16 = sshll.u32 [#allocation2], 4
      %s17 = int_to_ptr.vmem [resolvable:$true] %s16
      %22 = dma.hbm_to_vmem [thread:$0]  %s0, 256, %s17, [#allocation3], 128, 128, 8
    $region5: #{tpu_custom_call.1} parent=1 // pred_fallthru
      _
    // Predicated region
    $region6: #{tpu_custom_call.1} parent=1 // pred_check
      _
    $region7: #{tpu_custom_call.1} parent=1 // pred_check_branch
      %24 = sbr.rel (0) target = $region9
    $region8: #{tpu_custom_call.1} parent=1 // pred_region
      %s26 = ssub.s32 2048, 2048
      %27 = vsyncadd [#allocation6], %s26
      %s28 = sshll.u32 [#allocation5], 4
      %s29 = int_to_ptr.vmem [resolvable:$true] %s28
      %34 = dma.hbm_to_vmem [thread:$0]  %s1, 2048, %s29, [#allocation6], 128, 128, 8
    $region9: #{tpu_custom_call.1} parent=1 // pred_fallthru
      _
    // Predicated region
    $region10: #{tpu_custom_call.1} parent=1 // pred_check
      _
    $region11: #{tpu_custom_call.1} parent=1 // pred_check_branch
      %36 = sbr.rel (0) target = $region13
    $region12: #{tpu_custom_call.1} parent=1 // pred_region
      _
    $region13: #{tpu_custom_call.1} parent=1 // pred_fallthru
      _
    // Predicated region
    $region14: #{tpu_custom_call.1} parent=1 // pred_check
      _
    $region15: #{tpu_custom_call.1} parent=1 // pred_check_branch
      %38 = sbr.rel (0) target = $region17
    $region16: #{tpu_custom_call.1} parent=1 // pred_region
      %39 = dma.done [#allocation3], 256
    $region17: #{tpu_custom_call.1} parent=1 // pred_fallthru
      _
    // Predicated region
    $region18: #{tpu_custom_call.1} parent=1 // pred_check
      _
    $region19: #{tpu_custom_call.1} parent=1 // pred_check_branch
      %41 = sbr.rel (0) target = $region21
    $region20: #{tpu_custom_call.1} parent=1 // pred_region
      %42 = dma.done [#allocation6], 2048
    $region21: #{tpu_custom_call.1} parent=1 // pred_fallthru
      _
    %v43 = vld [vmem:[#allocation2] sm:$0xff]
    %v44 = vld [vmem:[#allocation2 + $0x8] sm:$0xff]
    %v45 = vmul.f32 %v43, %v43
    %v46 = vmul.f32 %v44, %v44
    %v47 = vpack.c.bf16 %v46, %v45
    %v48 = vunpack.c.l.bf16 %v47
    %v49 = vunpack.c.h.bf16 %v47
    %v50 = vsub.f32 %v45, %v48
    %v51 = vsub.f32 %v46, %v49
    %v52 = vpack.c.bf16 %v51, %v50
    %v53 = vunpack.c.l.bf16 %v52
    %v54 = vunpack.c.h.bf16 %v52
    %v55 = vsub.f32 %v50, %v53
    %v56 = vsub.f32 %v51, %v54
    %v57 = vld [vmem:[#allocation5] sm:$0xff]
    %v58 = vld [vmem:[#allocation5 + $0x8] sm:$0xff]
    %v59 = vld [vmem:[#allocation5 + $0x10] sm:$0xff]
    %v60 = vld [vmem:[#allocation5 + $0x18] sm:$0xff]
    %v61 = vld [vmem:[#allocation5 + $0x20] sm:$0xff]
    %v62 = vld [vmem:[#allocation5 + $0x28] sm:$0xff]
    %v63 = vld [vmem:[#allocation5 + $0x30] sm:$0xff]
    %v64 = vld [vmem:[#allocation5 + $0x38] sm:$0xff]
    %v65 = vld [vmem:[#allocation5 + $0x40] sm:$0xff]
    %v66 = vld [vmem:[#allocation5 + $0x48] sm:$0xff]
    %v67 = vld [vmem:[#allocation5 + $0x50] sm:$0xff]
    %v68 = vld [vmem:[#allocation5 + $0x58] sm:$0xff]
    %v69 = vld [vmem:[#allocation5 + $0x60] sm:$0xff]
    %v70 = vld [vmem:[#allocation5 + $0x68] sm:$0xff]
    %v71 = vld [vmem:[#allocation5 + $0x70] sm:$0xff]
    %v72 = vld [vmem:[#allocation5 + $0x78] sm:$0xff]
    %73 = vmatprep.subr.mxu0 0.0
    %74 = vmatpush1.msra.mxu0 %v72
    %75 = vmatprep.subr.mxu0 0.0
    %76 = vmatpush1.msra.mxu0 %v71
    %77 = vmatprep.subr.mxu0 0.0
    %78 = vmatpush1.msra.mxu0 %v70
    %79 = vmatprep.subr.mxu0 0.0
    %80 = vmatpush1.msra.mxu0 %v69
    %81 = vmatprep.subr.mxu0 0.0
    %82 = vmatpush1.msra.mxu0 %v68
    %83 = vmatprep.subr.mxu0 0.0
    %84 = vmatpush1.msra.mxu0 %v67
    %85 = vmatprep.subr.mxu0 0.0
    %86 = vmatpush1.msra.mxu0 %v66
    %87 = vmatprep.subr.mxu0 0.0
    %88 = vmatpush1.msra.mxu0 %v65
    %89 = vmatprep.subr.mxu0 0.0
    %90 = vmatpush1.msra.mxu0 %v64
    %91 = vmatprep.subr.mxu0 0.0
    %92 = vmatpush1.msra.mxu0 %v63
    %93 = vmatprep.subr.mxu0 0.0
    %94 = vmatpush1.msra.mxu0 %v62
    %95 = vmatprep.subr.mxu0 0.0
    %96 = vmatpush1.msra.mxu0 %v61
    %97 = vmatprep.subr.mxu0 0.0
    %98 = vmatpush1.msra.mxu0 %v60
    %99 = vmatprep.subr.mxu0 0.0
    %100 = vmatpush1.msra.mxu0 %v59
    %101 = vmatprep.subr.mxu0 0.0
    %102 = vmatpush1.msra.mxu0 %v58
    %103 = vmatprep.subr.mxu0 0.0
    %104 = vmatpush1.msra.mxu0 %v57
    %105 = vmatprep.subr.mxu0 0.0
    %106 = vmatpush2.msra.mxu0 0.0
    %107 = vmatprep.subr.mxu0 0.0
    %108 = vmatpush2.msra.mxu0 0.0
    %109 = vmatprep.subr.mxu0 0.0
    %110 = vmatpush2.msra.mxu0 0.0
    %111 = vmatprep.subr.mxu0 0.0
    %112 = vmatpush2.msra.mxu0 0.0
    %113 = vmatprep.subr.mxu0 0.0
    %114 = vmatpush2.msra.mxu0 0.0
    %115 = vmatprep.subr.mxu0 0.0
    %116 = vmatpush2.msra.mxu0 0.0
    %117 = vmatprep.subr.mxu0 0.0
    %118 = vmatpush2.msra.mxu0 0.0
    %119 = vmatprep.subr.mxu0 0.0
    %120 = vmatpush2.msra.mxu0 0.0
    %121 = vmatprep.subr.mxu0 0.0
    %122 = vmatpush2.msra.mxu0 0.0
    %123 = vmatprep.subr.mxu0 0.0
    %124 = vmatpush2.msra.mxu0 0.0
    %125 = vmatprep.subr.mxu0 0.0
    %126 = vmatpush2.msra.mxu0 0.0
    %127 = vmatprep.subr.mxu0 0.0
    %128 = vmatpush2.msra.mxu0 0.0
    %129 = vmatprep.subr.mxu0 0.0
    %130 = vmatpush2.msra.mxu0 0.0
    %131 = vmatprep.subr.mxu0 0.0
    %132 = vmatpush2.msra.mxu0 0.0
    %133 = vmatprep.subr.mxu0 0.0
    %134 = vmatpush2.msra.mxu0 0.0
    %135 = vmatprep.subr.mxu0 0.0
    %136 = vmatpush2.msra.mxu0 0.0
    %137 = vmatprep.mubr.f32.mxu0 0.0
    %138 = vmatmul.mubr.f32.gmra.mxu0 %v53
    %v139 = vpop.f32.mrf.mxu0
    %v140 = vadd.f32 0.0, %v139
    %v141 = vpop.f32.mrf.mxu0
    %142 = vmatprep.mubr.f32.mxu0 0.0
    %143 = vmatmul.mubr.f32.gmra.mxu0 %v54
    %v144 = vpop.f32.mrf.mxu0
    %v145 = vadd.f32 0.0, %v144
    %v146 = vpop.f32.mrf.mxu0
    %147 = vdwg.mxu0
    %148 = vmatprep.subr.mxu0 0.0
    %149 = vmatpush1.msra.mxu0 %v72
    %150 = vmatprep.subr.mxu0 0.0
    %151 = vmatpush1.msra.mxu0 %v71
    %152 = vmatprep.subr.mxu0 0.0
    %153 = vmatpush1.msra.mxu0 %v70
    %154 = vmatprep.subr.mxu0 0.0
    %155 = vmatpush1.msra.mxu0 %v69
    %156 = vmatprep.subr.mxu0 0.0
    %157 = vmatpush1.msra.mxu0 %v68
    %158 = vmatprep.subr.mxu0 0.0
    %159 = vmatpush1.msra.mxu0 %v67
    %160 = vmatprep.subr.mxu0 0.0
    %161 = vmatpush1.msra.mxu0 %v66
    %162 = vmatprep.subr.mxu0 0.0
    %163 = vmatpush1.msra.mxu0 %v65
    %164 = vmatprep.subr.mxu0 0.0
    %165 = vmatpush1.msra.mxu0 %v64
    %166 = vmatprep.subr.mxu0 0.0
    %167 = vmatpush1.msra.mxu0 %v63
    %168 = vmatprep.subr.mxu0 0.0
    %169 = vmatpush1.msra.mxu0 %v62
    %170 = vmatprep.subr.mxu0 0.0
    %171 = vmatpush1.msra.mxu0 %v61
    %172 = vmatprep.subr.mxu0 0.0
    %173 = vmatpush1.msra.mxu0 %v60
    %174 = vmatprep.subr.mxu0 0.0
    %175 = vmatpush1.msra.mxu0 %v59
    %176 = vmatprep.subr.mxu0 0.0
    %177 = vmatpush1.msra.mxu0 %v58
    %178 = vmatprep.subr.mxu0 0.0
    %179 = vmatpush1.msra.mxu0 %v57
    %180 = vmatprep.subr.mxu0 0.0
    %181 = vmatpush2.msra.mxu0 0.0
    %182 = vmatprep.subr.mxu0 0.0
    %183 = vmatpush2.msra.mxu0 0.0
    %184 = vmatprep.subr.mxu0 0.0
    %185 = vmatpush2.msra.mxu0 0.0
    %186 = vmatprep.subr.mxu0 0.0
    %187 = vmatpush2.msra.mxu0 0.0
    %188 = vmatprep.subr.mxu0 0.0
    %189 = vmatpush2.msra.mxu0 0.0
    %190 = vmatprep.subr.mxu0 0.0
    %191 = vmatpush2.msra.mxu0 0.0
    %192 = vmatprep.subr.mxu0 0.0
    %193 = vmatpush2.msra.mxu0 0.0
    %194 = vmatprep.subr.mxu0 0.0
    %195 = vmatpush2.msra.mxu0 0.0
    %196 = vmatprep.subr.mxu0 0.0
    %197 = vmatpush2.msra.mxu0 0.0
    %198 = vmatprep.subr.mxu0 0.0
    %199 = vmatpush2.msra.mxu0 0.0
    %200 = vmatprep.subr.mxu0 0.0
    %201 = vmatpush2.msra.mxu0 0.0
    %202 = vmatprep.subr.mxu0 0.0
    %203 = vmatpush2.msra.mxu0 0.0
    %204 = vmatprep.subr.mxu0 0.0
    %205 = vmatpush2.msra.mxu0 0.0
    %206 = vmatprep.subr.mxu0 0.0
    %207 = vmatpush2.msra.mxu0 0.0
    %208 = vmatprep.subr.mxu0 0.0
    %209 = vmatpush2.msra.mxu0 0.0
    %210 = vmatprep.subr.mxu0 0.0
    %211 = vmatpush2.msra.mxu0 0.0
    %212 = vmatprep.mubr.f32.mxu0 0.0
    %213 = vmatmul.mubr.f32.gmra.mxu0 %v48
    %v214 = vpop.f32.mrf.mxu0
    %v215 = vadd.f32 %v140, %v214
    %v216 = vpop.f32.mrf.mxu0
    %217 = vmatprep.mubr.f32.mxu0 0.0
    %218 = vmatmul.mubr.f32.gmra.mxu0 %v49
    %v219 = vpop.f32.mrf.mxu0
    %v220 = vadd.f32 %v145, %v219
    %v221 = vpop.f32.mrf.mxu0
    %222 = vdwg.mxu0
    %223 = vmatprep.subr.mxu0 0.0
    %224 = vmatpush1.msra.mxu0 %v72
    %225 = vmatprep.subr.mxu0 0.0
    %226 = vmatpush1.msra.mxu0 %v71
    %227 = vmatprep.subr.mxu0 0.0
    %228 = vmatpush1.msra.mxu0 %v70
    %229 = vmatprep.subr.mxu0 0.0
    %230 = vmatpush1.msra.mxu0 %v69
    %231 = vmatprep.subr.mxu0 0.0
    %232 = vmatpush1.msra.mxu0 %v68
    %233 = vmatprep.subr.mxu0 0.0
    %234 = vmatpush1.msra.mxu0 %v67
    %235 = vmatprep.subr.mxu0 0.0
    %236 = vmatpush1.msra.mxu0 %v66
    %237 = vmatprep.subr.mxu0 0.0
    %238 = vmatpush1.msra.mxu0 %v65
    %239 = vmatprep.subr.mxu0 0.0
    %240 = vmatpush1.msra.mxu0 %v64
    %241 = vmatprep.subr.mxu0 0.0
    %242 = vmatpush1.msra.mxu0 %v63
    %243 = vmatprep.subr.mxu0 0.0
    %244 = vmatpush1.msra.mxu0 %v62
    %245 = vmatprep.subr.mxu0 0.0
    %246 = vmatpush1.msra.mxu0 %v61
    %247 = vmatprep.subr.mxu0 0.0
    %248 = vmatpush1.msra.mxu0 %v60
    %249 = vmatprep.subr.mxu0 0.0
    %250 = vmatpush1.msra.mxu0 %v59
    %251 = vmatprep.subr.mxu0 0.0
    %252 = vmatpush1.msra.mxu0 %v58
    %253 = vmatprep.subr.mxu0 0.0
    %254 = vmatpush1.msra.mxu0 %v57
    %255 = vmatprep.subr.mxu0 0.0
    %256 = vmatpush2.msra.mxu0 0.0
    %257 = vmatprep.subr.mxu0 0.0
    %258 = vmatpush2.msra.mxu0 0.0
    %259 = vmatprep.subr.mxu0 0.0
    %260 = vmatpush2.msra.mxu0 0.0
    %261 = vmatprep.subr.mxu0 0.0
    %262 = vmatpush2.msra.mxu0 0.0
    %263 = vmatprep.subr.mxu0 0.0
    %264 = vmatpush2.msra.mxu0 0.0
    %265 = vmatprep.subr.mxu0 0.0
    %266 = vmatpush2.msra.mxu0 0.0
    %267 = vmatprep.subr.mxu0 0.0
    %268 = vmatpush2.msra.mxu0 0.0
    %269 = vmatprep.subr.mxu0 0.0
    %270 = vmatpush2.msra.mxu0 0.0
    %271 = vmatprep.subr.mxu0 0.0
    %272 = vmatpush2.msra.mxu0 0.0
    %273 = vmatprep.subr.mxu0 0.0
    %274 = vmatpush2.msra.mxu0 0.0
    %275 = vmatprep.subr.mxu0 0.0
    %276 = vmatpush2.msra.mxu0 0.0
    %277 = vmatprep.subr.mxu0 0.0
    %278 = vmatpush2.msra.mxu0 0.0
    %279 = vmatprep.subr.mxu0 0.0
    %280 = vmatpush2.msra.mxu0 0.0
    %281 = vmatprep.subr.mxu0 0.0
    %282 = vmatpush2.msra.mxu0 0.0
    %283 = vmatprep.subr.mxu0 0.0
    %284 = vmatpush2.msra.mxu0 0.0
    %285 = vmatprep.subr.mxu0 0.0
    %286 = vmatpush2.msra.mxu0 0.0
    %287 = vmatprep.mubr.f32.mxu0 0.0
    %288 = vmatmul.mubr.f32.gmra.mxu0 %v55
    %v289 = vpop.f32.mrf.mxu0
    %v290 = vadd.f32 0.0, %v289
    %v291 = vpop.f32.mrf.mxu0
    %292 = vmatprep.mubr.f32.mxu0 0.0
    %293 = vmatmul.mubr.f32.gmra.mxu0 %v56
    %v294 = vpop.f32.mrf.mxu0
    %v295 = vadd.f32 0.0, %v294
    %v296 = vpop.f32.mrf.mxu0
    %297 = vdwg.mxu0
    %v298 = vadd.f32 %v215, %v290
    %v299 = vadd.f32 %v220, %v295
    %v300 = vmul.f32 %v298, 0.03125
    %v301 = vmul.f32 %v299, 0.03125
    %v302 = vadd.f32 %v300, 1e-06
    %v303 = vadd.f32 %v301, 1e-06
    %v304 = vrsqrt.pop %v302
    %v305 = vrsqrt.pop %v303
    %v306 = vmul.f32 %v43, %v304
    %v307 = vmul.f32 %v44, %v305
    %v308 = vld [vmem:[%s2] sm:$0x1]
    %v310 = vlaneseq
    %v311 = vshrl.u32 %v310, 7
    %v312 = vsub.s32 0, %v311
    %v313 = vrot.slane %v308, %v312
    %v315 = vmul.f32 %v313, %v306
    %v316 = vmul.f32 %v313, %v307
    %317 = vst [vmem:[#allocation7] sm:$0xff] %v315
    %318 = vst [vmem:[#allocation7 + $0x8] sm:$0xff] %v316
    // Predicated region
    $region22: #{tpu_custom_call.1} parent=1 // pred_check
      _
    $region23: #{tpu_custom_call.1} parent=1 // pred_check_branch
      %320 = sbr.rel (0) target = $region25
    $region24: #{tpu_custom_call.1} parent=1 // pred_region
      %s322 = ssub.s32 256, 256
      %323 = vsyncadd [#allocation4], %s322
      %s324 = sshll.u32 [#allocation7], 4
      %s325 = int_to_ptr.vmem [resolvable:$true] %s324
      %330 = dma.vmem_to_hbm [thread:$0]  %s325, 256, %s3, [#allocation4], 128, 128, 8
    $region25: #{tpu_custom_call.1} parent=1 // pred_fallthru
      _
    // Predicated region
    $region26: #{tpu_custom_call.1} parent=1 // pred_check
      _
    $region27: #{tpu_custom_call.1} parent=1 // pred_check_branch
      %332 = sbr.rel (0) target = $region29
    $region28: #{tpu_custom_call.1} parent=1 // pred_region
      %333 = dma.done [#allocation4], 256
    $region29: #{tpu_custom_call.1} parent=1 // pred_fallthru
      _
    %334 = vsyncpa [#allocation3], 1
    %335 = vsyncpa [#allocation6], 1
    %336 = vsyncpa [#allocation4], 1

</llo_original>
